<compile_context>
chip_gen: v7x
topology: tpu7x:2x2x1
jax: 0.10.0
libtpu: 0.0.40
codegen_flags: <defaults>
</compile_context>

<pallas_src>
import functools

import jax
import jax.numpy as jnp
from jax.experimental import pallas as pl
from jax.experimental.pallas import tpu as pltpu


def _round_up(x, m):
    return ((x + m - 1) // m) * m


def _gumbel_gating_kernel(*refs, mode, tau, num_choices):
    """One row-tile of the gate, computed in the transposed (C, TM) layout.

    refs (eval):     x_ref, w_ref, b_ref, o_ref
    refs (train_*):  x_ref, w_ref, b_ref, noise_ref, o_ref
      x_ref     : VMEM (TM, H) native dtype  row tile of the flattened input
      w_ref     : VMEM (C, H)  float32       fc weight (PyTorch layout), resident
      b_ref     : VMEM (C, 1)  float32       fc bias, resident
      noise_ref : VMEM (1, TM) float32       uniform [0,1)   (train_hard)
                  VMEM (C, TM) float32       Gumbel(0,1)     (train_soft)
      o_ref     : VMEM (C, TM) input dtype   transposed output tile
    """
    if mode == "eval":
        x_ref, w_ref, b_ref, o_ref = refs
        noise_ref = None
    else:
        x_ref, w_ref, b_ref, noise_ref, o_ref = refs

    # logits_T[c, m] = sum_h w[c, h] * x[m, h] + b[c]   -> (C, TM), f32 accumulate.
    logits = jax.lax.dot_general(
        w_ref[...], x_ref[...].astype(jnp.float32),
        dimension_numbers=(((1,), (1,)), ((), ())),
        preferred_element_type=jnp.float32,
    ) + b_ref[...]

    if mode == "train_soft":
        # softmax((logits + gumbel) / tau) over the choices (sublane) axis.
        z = (logits + noise_ref[...]) * (1.0 / tau)
        m = jnp.max(z, axis=0, keepdims=True)
        e = jnp.exp(z - m)
        s = jnp.sum(e, axis=0, keepdims=True)
        o_ref[...] = (e / s).astype(o_ref.dtype)          # exact divide
    elif mode == "train_hard":
        # Forward value of hard gumbel-softmax = one_hot(argmax(logits + g)),
        # i.e. a Categorical(softmax(logits)) draw (tau only affects gradients).
        # Inverse-CDF with one uniform per row: log-free, minimal EUP work.
        # TODO(synk): noise stream cannot bit-match torch's gumbel_softmax sampler.
        m = jnp.max(logits, axis=0, keepdims=True)
        e = jnp.exp(logits - m)                            # (C, TM)
        total = jnp.sum(e, axis=0, keepdims=True)          # (1, TM)
        t = noise_ref[...] * total                         # threshold in [0, total)
        run = jnp.zeros_like(t)
        idx = jnp.zeros_like(t)
        for c in range(num_choices - 1):                   # tiny static unroll
            run = run + e[c:c + 1, :]
            idx = idx + (run < t).astype(jnp.float32)      # monotone -> counts leading trues
        iota_c = jax.lax.broadcasted_iota(jnp.int32, logits.shape, 0)
        o_ref[...] = (iota_c == idx.astype(jnp.int32)).astype(o_ref.dtype)
    else:
        # eval: one_hot(argmax(logits)); first-max index on ties (torch argmax rule).
        m = jnp.max(logits, axis=0, keepdims=True)
        iota_c = jax.lax.broadcasted_iota(jnp.int32, logits.shape, 0)
        first_max = jnp.min(jnp.where(logits == m, iota_c, num_choices),
                            axis=0, keepdims=True)
        o_ref[...] = (iota_c == first_max).astype(o_ref.dtype)


def _choose_tm(M, H, C, x_itemsize, out_itemsize, noise_rows,
               target_x_bytes=4 << 20, vmem_budget=36 << 20):
    """Adaptive row-tile size: ~target_x_bytes of x per tile, multiple of 128,
    double-buffered working set under the VMEM budget, >=2 grid steps if possible."""
    tm = max(128, target_x_bytes // max(1, H * x_itemsize))
    tm = _round_up(tm, 128)
    if M > 256:
        tm = min(tm, _round_up(-(-M // 2), 128))   # keep >= 2 grid steps
    tm = max(128, min(tm, _round_up(M, 128)))

    def usage(t):
        return (2 * t * H * x_itemsize             # x double buffer
                + 2 * noise_rows * t * 4           # noise double buffer
                + 2 * C * t * out_itemsize         # output double buffer
                + C * H * 4 + C * 128 * 4)         # resident weight + bias
    while tm > 128 and usage(tm) > vmem_budget:
        tm = max(128, _round_up(tm // 2, 128))
    return tm


def gumbel_gating_forward(x, w, b, *, mode="eval", tau=1.0, key=None, min_choice=0):
    """x: (..., H); w: (C, H) (PyTorch nn.Linear layout); b: (C,).
    mode: "eval" | "train_hard" | "train_soft"; key: jax PRNG key (training only).
    Returns (..., C + min_choice) gate values in x.dtype.
    TODO(synk): trainable gs_tau (nn.Parameter) is treated as a static float here."""
    assert mode in ("eval", "train_hard", "train_soft")
    lead = x.shape[:-1]
    H = x.shape[-1]
    C = w.shape[0]
    x2d = x.reshape(-1, H)                          # native dtype, no copy/cast
    M = x2d.shape[0]

    w2d = w.astype(jnp.float32)                     # (C, H), resident in VMEM
    b2d = b.astype(jnp.float32).reshape(C, 1)       # (C, 1), resident in VMEM

    noise_rows = {"eval": 0, "train_hard": 1, "train_soft": C}[mode]
    itemsize = jnp.dtype(x.dtype).itemsize
    tm = _choose_tm(M, H, C, itemsize, itemsize, noise_rows)
    grid = (-(-M // tm),)                           # cdiv; ragged last block OK

    in_specs = [
        pl.BlockSpec((tm, H), lambda i: (i, 0)),    # x row tile (streamed)
        pl.BlockSpec((C, H), lambda i: (0, 0)),     # weight (resident)
        pl.BlockSpec((C, 1), lambda i: (0, 0)),     # bias (resident)
    ]
    inputs = [x2d, w2d, b2d]
    if mode == "train_hard":
        assert key is not None, "training modes need a PRNG key"
        u = jax.random.uniform(key, (1, M), dtype=jnp.float32)   # one uniform per row
        in_specs.append(pl.BlockSpec((1, tm), lambda i: (0, i)))
        inputs.append(u)
    elif mode == "train_soft":
        assert key is not None, "training modes need a PRNG key"
        g = jax.random.gumbel(key, (C, M), dtype=jnp.float32)    # Gumbel(0,1)
        in_specs.append(pl.BlockSpec((C, tm), lambda i: (0, i)))
        inputs.append(g)

    kernel = functools.partial(_gumbel_gating_kernel, mode=mode,
                               tau=float(tau), num_choices=C)

    out_t = pl.pallas_call(
        kernel,
        out_shape=jax.ShapeDtypeStruct((C, M), x.dtype),
        grid=grid,
        in_specs=in_specs,
        out_specs=pl.BlockSpec((C, tm), lambda i: (0, i)),       # lane-dense in M
        compiler_params=pltpu.CompilerParams(
            dimension_semantics=("parallel",),      # shard row tiles across v7x's 2 TCs
            vmem_limit_bytes=48 * 1024 * 1024,
        ),
    )(*inputs)

    # Lane-dense (C, M) kernel output -> caller layout (..., C).
    out = out_t.T.reshape(*lead, C)
    if min_choice > 0:
        zeros = jnp.zeros((*lead, min_choice), dtype=out.dtype)
        out = jnp.concatenate([zeros, out], axis=-1)
    return out


def _reference_eval(x, w, b):
    logits = jnp.einsum("...h,ch->...c", x.astype(jnp.float32), w) + b
    idx = jnp.argmax(logits, axis=-1)
    return jax.nn.one_hot(idx, w.shape[0], dtype=x.dtype)


if __name__ == "__main__":
    hidden_dim = 32
    num_choices = 4
    batch, seq = 2, 8

    key = jax.random.PRNGKey(0)
    kx, kw, kb, kh, ks = jax.random.split(key, 5)
    x = jax.random.normal(kx, (batch, seq, hidden_dim), dtype=jnp.float32)

    # nn.Linear-style uniform(-1/sqrt(H), 1/sqrt(H)) init, deterministic.
    bound = 1.0 / (hidden_dim ** 0.5)
    w = jax.random.uniform(kw, (num_choices, hidden_dim),
                           minval=-bound, maxval=bound, dtype=jnp.float32)
    b = jax.random.uniform(kb, (num_choices,),
                           minval=-bound, maxval=bound, dtype=jnp.float32)

    # --- eval forward (module.eval()): one_hot(argmax(fc(x))) ------------------
    out_eval = jax.block_until_ready(gumbel_gating_forward(x, w, b, mode="eval"))
    ref_eval = _reference_eval(x, w, b)
    assert out_eval.shape == (batch, seq, num_choices)
    assert jnp.allclose(out_eval, ref_eval), "eval one-hot mismatch"

    # --- eval forward with bf16 input streamed in its native dtype -------------
    x_bf16 = x.astype(jnp.bfloat16)
    out_bf16 = jax.block_until_ready(gumbel_gating_forward(x_bf16, w, b, mode="eval"))
    ref_bf16 = _reference_eval(x_bf16, w, b)
    assert out_bf16.dtype == jnp.bfloat16
    assert jnp.allclose(out_bf16.astype(jnp.float32), ref_bf16.astype(jnp.float32))

    # --- training forward, gs_hard=True (module default) -----------------------
    out_hard = jax.block_until_ready(
        gumbel_gating_forward(x, w, b, mode="train_hard", tau=1.0, key=kh))
    assert out_hard.shape == (batch, seq, num_choices)
    assert bool(jnp.all((out_hard == 0.0) | (out_hard == 1.0)))
    assert jnp.allclose(jnp.sum(out_hard, axis=-1), 1.0)

    # --- training forward, gs_hard=False (soft gumbel-softmax) -----------------
    out_soft = jax.block_until_ready(
        gumbel_gating_forward(x, w, b, mode="train_soft", tau=0.7, key=ks))
    assert out_soft.shape == (batch, seq, num_choices)
    assert bool(jnp.all(out_soft >= 0.0))
    assert jnp.allclose(jnp.sum(out_soft, axis=-1), 1.0, atol=1e-5)  # exact divide

    # --- min_choice padding path ------------------------------------------------
    out_min = jax.block_until_ready(
        gumbel_gating_forward(x, w, b, mode="eval", min_choice=2))
    assert out_min.shape == (batch, seq, num_choices + 2)
    assert bool(jnp.all(out_min[..., :2] == 0.0))

    print("KERNEL_OK")
</pallas_src>

<mosaic_0001>
module attributes {stable_mosaic.version = 11 : i64} {
  func.func @_gumbel_gating_kernel(%arg0: i32, %arg1: memref<128x32xf32, #tpu.memory_space<vmem>>, %arg2: memref<4x32xf32, #tpu.memory_space<vmem>>, %arg3: memref<4x1xf32, #tpu.memory_space<vmem>>, %arg4: memref<4x128xf32, #tpu.memory_space<vmem>>) attributes {dimension_semantics = [#tpu.dimension_semantics<parallel>], iteration_bounds = array<i64: 1>, scalar_prefetch = 0 : i64, scratch_operands = 0 : i64, tpu.core_type = #tpu.core_type<tc>, window_params = [{transform_indices = @transform_0, window_bounds = array<i64: 128, 32>}, {pipeline_mode = #tpu.pipeline_mode<synchronous>, transform_indices = @transform_1, window_bounds = array<i64: 4, 32>}, {pipeline_mode = #tpu.pipeline_mode<synchronous>, transform_indices = @transform_2, window_bounds = array<i64: 4, 1>}, {transform_indices = @transform_3, window_bounds = array<i64: 4, 128>}]} {
    %c0 = arith.constant 0 : index
    %c0_0 = arith.constant 0 : index
    %0 = vector.load %arg2[%c0, %c0_0] : memref<4x32xf32, #tpu.memory_space<vmem>>, vector<4x32xf32>
    %c0_1 = arith.constant 0 : index
    %c0_2 = arith.constant 0 : index
    %1 = vector.load %arg1[%c0_1, %c0_2] : memref<128x32xf32, #tpu.memory_space<vmem>>, vector<128x32xf32>
    %cst = arith.constant dense<0.000000e+00> : vector<4x128xf32>
    %2 = tpu.matmul %0, %1, %cst {dimension_numbers = #tpu.dot_dimension_numbers<[1], [1], [0], [0], [0, 0, 1, 0], [], []>} : vector<4x32xf32>, vector<128x32xf32>, vector<4x128xf32> -> vector<4x128xf32>
    %c0_3 = arith.constant 0 : index
    %c0_4 = arith.constant 0 : index
    %3 = vector.load %arg3[%c0_3, %c0_4] : memref<4x1xf32, #tpu.memory_space<vmem>>, vector<4x1xf32>
    %4 = vector.broadcast %3 : vector<4x1xf32> to vector<4x128xf32>
    %5 = arith.addf %2, %4 : vector<4x128xf32>
    %cst_5 = arith.constant dense<0xFF800000> : vector<128xf32>
    %6 = vector.multi_reduction <maximumf>, %5, %cst_5 [0] : vector<4x128xf32> to vector<128xf32>
    %7 = vector.shape_cast %6 : vector<128xf32> to vector<1x128xf32>
    %8 = tpu.iota {dimensions = array<i32: 0>} : vector<4x128xi32>
    %9 = vector.broadcast %7 : vector<1x128xf32> to vector<4x128xf32>
    %10 = arith.cmpf oeq, %5, %9 : vector<4x128xf32>
    %c4_i32 = arith.constant 4 : i32
    %11 = vector.broadcast %c4_i32 : i32 to vector<4x128xi32>
    %12 = arith.select %10, %8, %11 : vector<4x128xi1>, vector<4x128xi32>
    %cst_6 = arith.constant dense<2147483647> : vector<128xi32>
    %13 = vector.multi_reduction <minsi>, %12, %cst_6 [0] : vector<4x128xi32> to vector<128xi32>
    %14 = vector.shape_cast %13 : vector<128xi32> to vector<1x128xi32>
    %15 = vector.broadcast %14 : vector<1x128xi32> to vector<4x128xi32>
    %16 = arith.cmpi eq, %8, %15 : vector<4x128xi32>
    %17 = arith.extui %16 : vector<4x128xi1> to vector<4x128xi32>
    %18 = arith.sitofp %17 : vector<4x128xi32> to vector<4x128xf32>
    %c0_7 = arith.constant 0 : index
    %c0_8 = arith.constant 0 : index
    %19 = vector.load %arg4[%c0_7, %c0_8] : memref<4x128xf32, #tpu.memory_space<vmem>>, vector<4x128xf32>
    tpu.vector_store %arg4[%c0_7, %c0_8], %18 {strides = array<i32>} : memref<4x128xf32, #tpu.memory_space<vmem>>, vector<4x128xf32>,
    return
  }
  func.func @transform_0(%arg0: i32) -> (i32, i32) {
    %c0_i32 = arith.constant 0 : i32
    %c0_i32_0 = arith.constant 0 : i32
    return %arg0, %c0_i32 : i32, i32
  }
  func.func @transform_1(%arg0: i32) -> (i32, i32) {
    %c0_i32 = arith.constant 0 : i32
    %c0_i32_0 = arith.constant 0 : i32
    %c0_i32_1 = arith.constant 0 : i32
    return %c0_i32, %c0_i32_0 : i32, i32
  }
  func.func @transform_2(%arg0: i32) -> (i32, i32) {
    %c0_i32 = arith.constant 0 : i32
    %c0_i32_0 = arith.constant 0 : i32
    %c0_i32_1 = arith.constant 0 : i32
    return %c0_i32, %c0_i32_0 : i32, i32
  }
  func.func @transform_3(%arg0: i32) -> (i32, i32) {
    %c0_i32 = arith.constant 0 : i32
    %c0_i32_0 = arith.constant 0 : i32
    return %c0_i32, %arg0 : i32, i32
  }
}

</mosaic_0001>

<llo_original>
// kernel: tpu_custom_call.1
$region0: #{tpu_custom_call.1}
  #allocation0 [shape = 'u32[]', space=smem, size = 0x4, offset = 0x4, fixed_abs, tag = 'smem constant byte address 0x4 - core index']
  #allocation1 [shape = 'u32[144,128]{1,0:T(1,128)}', space=vmem, size = 0x12000, scoped, tag = 'internal scratch']
  %s0 = inlined_call_operand.hbm [shape: f32[16,32], index: 0, kind: input, shape index: {}]
  %s1 = inlined_call_operand.vmem [shape: f32[4,32], index: 1, kind: input, shape index: {}]
  %s2 = inlined_call_operand.vmem [shape: f32[4,1], index: 2, kind: input, shape index: {}]
  %s3 = inlined_call_operand.hbm [shape: f32[4,16], index: 3, kind: output, shape index: {}]
  %s4 = sld [smem:[#allocation0]]
  $region26: #{tpu_custom_call.1} parent=0
    _
  %s6 = ssub.s32 1, %s4
  %s7 = scalar_select 0, %s6, %s4
  $region1: #{tpu_custom_call.1} parent=0
    #allocation2 [shape = 'u8[65536]{0}', space=vmem, size = 0x10000, scoped, tag = 'input window, operand 0, single buffered']
    #allocation3 [shape = 's32[1]{0}', space=sflag, size = 0x4, scoped, tag = 'scoped memory for tpu_custom_call.1']
    #allocation4 [shape = 's32[1]{0}', space=sflag, size = 0x4, scoped, tag = 'scoped memory for tpu_custom_call.1']
    #allocation5 [shape = 'u8[2048]{0}', space=vmem, size = 0x800, scoped, tag = 'output window, operand 0, single buffered']
    %8 = vsyncpa [#allocation3], 0
    %9 = vsyncpa [#allocation4], 0
    // Predicated region
    $region2: #{tpu_custom_call.1} parent=1 // pred_check
      _
    $region3: #{tpu_custom_call.1} parent=1 // pred_check_branch
      %11 = sbr.rel (0) target = $region5
    $region4: #{tpu_custom_call.1} parent=1 // pred_region
      %s13 = ssub.s32 2048, 256
      %14 = vsyncadd [#allocation3], %s13
      %s15 = sshll.u32 [#allocation2], 4
      %s16 = int_to_ptr.vmem [resolvable:$true] %s15
      %21 = dma.hbm_to_vmem [thread:$0]  %s0, 256, %s16, [#allocation3], 128, 128, 8
    $region5: #{tpu_custom_call.1} parent=1 // pred_fallthru
      _
    // Predicated region
    $region6: #{tpu_custom_call.1} parent=1 // pred_check
      _
    $region7: #{tpu_custom_call.1} parent=1 // pred_check_branch
      %23 = sbr.rel (0) target = $region9
    $region8: #{tpu_custom_call.1} parent=1 // pred_region
      _
    $region9: #{tpu_custom_call.1} parent=1 // pred_fallthru
      _
    // Predicated region
    $region10: #{tpu_custom_call.1} parent=1 // pred_check
      _
    $region11: #{tpu_custom_call.1} parent=1 // pred_check_branch
      %25 = sbr.rel (0) target = $region13
    $region12: #{tpu_custom_call.1} parent=1 // pred_region
      _
    $region13: #{tpu_custom_call.1} parent=1 // pred_fallthru
      _
    // Predicated region
    $region14: #{tpu_custom_call.1} parent=1 // pred_check
      _
    $region15: #{tpu_custom_call.1} parent=1 // pred_check_branch
      %27 = sbr.rel (0) target = $region17
    $region16: #{tpu_custom_call.1} parent=1 // pred_region
      %28 = dma.done [#allocation3], 2048
    $region17: #{tpu_custom_call.1} parent=1 // pred_fallthru
      _
    %v29 = vld [vmem:[%s1] sm:$0xf]
    %v30 = vld [vmem:[#allocation2] sm:$0xff]
    %v31 = vld [vmem:[#allocation2 + $0x8] sm:$0xff]
    %v32 = vld [vmem:[#allocation2 + $0x10] sm:$0xff]
    %v33 = vld [vmem:[#allocation2 + $0x18] sm:$0xff]
    %v34 = vld [vmem:[#allocation2 + $0x20] sm:$0xff]
    %v35 = vld [vmem:[#allocation2 + $0x28] sm:$0xff]
    %v36 = vld [vmem:[#allocation2 + $0x30] sm:$0xff]
    %v37 = vld [vmem:[#allocation2 + $0x38] sm:$0xff]
    %v38 = vld [vmem:[#allocation2 + $0x40] sm:$0xff]
    %v39 = vld [vmem:[#allocation2 + $0x48] sm:$0xff]
    %v40 = vld [vmem:[#allocation2 + $0x50] sm:$0xff]
    %v41 = vld [vmem:[#allocation2 + $0x58] sm:$0xff]
    %v42 = vld [vmem:[#allocation2 + $0x60] sm:$0xff]
    %v43 = vld [vmem:[#allocation2 + $0x68] sm:$0xff]
    %v44 = vld [vmem:[#allocation2 + $0x70] sm:$0xff]
    %v45 = vld [vmem:[#allocation2 + $0x78] sm:$0xff]
    %v46 = vld [vmem:[%s2] sm:$0xf]
    %48 = vset.pattern.permute.xlu0 0
    %49 = vperm.xlu0 %48, %v46
    %v50 = vpop.permute.xlu0 %49
    %vm52 = vcmask 261120
    %v54 = vsel %vm52, %v29, 0
    %v57 = vsel %vm52, %v30, 0
    %v60 = vsel %vm52, %v31, 0
    %v63 = vsel %vm52, %v32, 0
    %v66 = vsel %vm52, %v33, 0
    %v69 = vsel %vm52, %v34, 0
    %v72 = vsel %vm52, %v35, 0
    %v75 = vsel %vm52, %v36, 0
    %v78 = vsel %vm52, %v37, 0
    %v81 = vsel %vm52, %v38, 0
    %v84 = vsel %vm52, %v39, 0
    %v87 = vsel %vm52, %v40, 0
    %v90 = vsel %vm52, %v41, 0
    %v93 = vsel %vm52, %v42, 0
    %v96 = vsel %vm52, %v43, 0
    %v99 = vsel %vm52, %v44, 0
    %v102 = vsel %vm52, %v45, 0
    %104 = vmatprep.subr.mxu0 0.0
    %105 = vmatpush1.xpose.msra.mxu0 %v57
    %106 = vmatprep.subr.mxu0 0.0
    %107 = vmatpush1.xpose.msra.mxu0 %v60
    %108 = vmatprep.subr.mxu0 0.0
    %109 = vmatpush1.xpose.msra.mxu0 %v63
    %110 = vmatprep.subr.mxu0 0.0
    %111 = vmatpush1.xpose.msra.mxu0 %v66
    %112 = vmatprep.subr.mxu0 0.0
    %113 = vmatpush1.xpose.msra.mxu0 %v69
    %114 = vmatprep.subr.mxu0 0.0
    %115 = vmatpush1.xpose.msra.mxu0 %v72
    %116 = vmatprep.subr.mxu0 0.0
    %117 = vmatpush1.xpose.msra.mxu0 %v75
    %118 = vmatprep.subr.mxu0 0.0
    %119 = vmatpush1.xpose.msra.mxu0 %v78
    %120 = vmatprep.subr.mxu0 0.0
    %121 = vmatpush1.xpose.msra.mxu0 %v81
    %122 = vmatprep.subr.mxu0 0.0
    %123 = vmatpush1.xpose.msra.mxu0 %v84
    %124 = vmatprep.subr.mxu0 0.0
    %125 = vmatpush1.xpose.msra.mxu0 %v87
    %126 = vmatprep.subr.mxu0 0.0
    %127 = vmatpush1.xpose.msra.mxu0 %v90
    %128 = vmatprep.subr.mxu0 0.0
    %129 = vmatpush1.xpose.msra.mxu0 %v93
    %130 = vmatprep.subr.mxu0 0.0
    %131 = vmatpush1.xpose.msra.mxu0 %v96
    %132 = vmatprep.subr.mxu0 0.0
    %133 = vmatpush1.xpose.msra.mxu0 %v99
    %134 = vmatprep.subr.mxu0 0.0
    %135 = vmatpush1.xpose.msra.mxu0 %v102
    %136 = vmatprep.subr.mxu0 0.0
    %137 = vmatpush1.xpose.msra.mxu0 0.0
    %138 = vmatprep.subr.mxu0 0.0
    %139 = vmatpush1.xpose.msra.mxu0 0.0
    %140 = vmatprep.subr.mxu0 0.0
    %141 = vmatpush1.xpose.msra.mxu0 0.0
    %142 = vmatprep.subr.mxu0 0.0
    %143 = vmatpush1.xpose.msra.mxu0 0.0
    %144 = vmatprep.subr.mxu0 0.0
    %145 = vmatpush1.xpose.msra.mxu0 0.0
    %146 = vmatprep.subr.mxu0 0.0
    %147 = vmatpush1.xpose.msra.mxu0 0.0
    %148 = vmatprep.subr.mxu0 0.0
    %149 = vmatpush1.xpose.msra.mxu0 0.0
    %150 = vmatprep.subr.mxu0 0.0
    %151 = vmatpush1.xpose.msra.mxu0 0.0
    %152 = vmatprep.subr.mxu0 0.0
    %153 = vmatpush1.xpose.msra.mxu0 0.0
    %154 = vmatprep.subr.mxu0 0.0
    %155 = vmatpush1.xpose.msra.mxu0 0.0
    %156 = vmatprep.subr.mxu0 0.0
    %157 = vmatpush1.xpose.msra.mxu0 0.0
    %158 = vmatprep.subr.mxu0 0.0
    %159 = vmatpush1.xpose.msra.mxu0 0.0
    %160 = vmatprep.subr.mxu0 0.0
    %161 = vmatpush1.xpose.msra.mxu0 0.0
    %162 = vmatprep.subr.mxu0 0.0
    %163 = vmatpush1.xpose.msra.mxu0 0.0
    %164 = vmatprep.subr.mxu0 0.0
    %165 = vmatpush1.xpose.msra.mxu0 0.0
    %166 = vmatprep.subr.mxu0 0.0
    %167 = vmatpush1.xpose.msra.mxu0 0.0
    %168 = vmatprep.mubr.f32.mxu0 0.0
    %169 = vmatmul.mubr.f32.gmra.mrb[0].mxu0 %v54
    %v170 = vpop.f32.mrb[0].mxu0
    %v171 = vadd.f32 %v50, %v170
    %v172 = vpop.f32.mrb[0].mxu0
    %173 = vdwg.mxu0
    %vm174 = vcmask 1043456
    %v175 = vsel %vm174, %v171, -inf
    %v176 = vrot.slane %v175, 4
    %v177 = vmax.f32 %v175, %v176
    %v178 = vrot.slane %v177, 2
    %v179 = vmax.f32 %v177, %v178
    %v180 = vrot.slane %v179, 1
    %v181 = vmax.f32 %v179, %v180
    %v182 = vlaneseq
    %v183 = vshrl.u32 %v182, 7
    %vm184 = vcmp.eq.f32.partialorder %v171, %v181
    %v185 = vsel %vm184, %v183, 4
    %v186 = vsel %vm174, %v185, 2147483647
    %v187 = vrot.slane %v186, 4
    %vm188 = vcmp.lt.s32.totalorder %v186, %v187
    %v189 = vsel %vm188, %v186, %v187
    %v190 = vrot.slane %v189, 2
    %vm191 = vcmp.lt.s32.totalorder %v189, %v190
    %v192 = vsel %vm191, %v189, %v190
    %v193 = vrot.slane %v192, 1
    %vm194 = vcmp.lt.s32.totalorder %v192, %v193
    %v195 = vsel %vm194, %v192, %v193
    %vm196 = vcmp.eq.s32.totalorder %v183, %v195
    %v197 = vsel %vm196, 1, 0
    %v198 = vcvt.s32.f32 %v197
    %199 = vst [vmem:[#allocation5] sm:$0xf] %v198
    // Predicated region
    $region18: #{tpu_custom_call.1} parent=1 // pred_check
      _
    $region19: #{tpu_custom_call.1} parent=1 // pred_check_branch
      %201 = sbr.rel (0) target = $region21
    $region20: #{tpu_custom_call.1} parent=1 // pred_region
      %s203 = ssub.s32 64, 64
      %204 = vsyncadd [#allocation4], %s203
      %s206 = sshll.u32 [#allocation5], 4
      %s207 = int_to_ptr.vmem [resolvable:$true] %s206
      %209 = dma.vmem_to_hbm [thread:$0]  %s207, 64, %s3, [#allocation4]
    $region21: #{tpu_custom_call.1} parent=1 // pred_fallthru
      _
    // Predicated region
    $region22: #{tpu_custom_call.1} parent=1 // pred_check
      _
    $region23: #{tpu_custom_call.1} parent=1 // pred_check_branch
      %211 = sbr.rel (0) target = $region25
    $region24: #{tpu_custom_call.1} parent=1 // pred_region
      %212 = dma.done [#allocation4], 64
    $region25: #{tpu_custom_call.1} parent=1 // pred_fallthru
      _
    %213 = vsyncpa [#allocation3], 1
    %214 = vsyncpa [#allocation4], 1

</llo_original>
